<compile_context>
chip_gen: v5e
topology: v5e:2x2
jax: 0.10.0
libtpu: 0.0.40
codegen_flags: <defaults>
</compile_context>

<pallas_src>
import functools

import jax
import jax.numpy as jnp
from jax.experimental import pallas as pl
from jax.experimental.pallas import tpu as pltpu


# -----------------------------------------------------------------------------
# Kernel
# -----------------------------------------------------------------------------
def critic_kernel(s_ref, a_ref, w1s_ref, w1a_ref, b1_ref, w2_ref, b2_ref,
                  w3_ref, b3_ref, o_ref):
    # fc1 + ReLU (f32 inputs/weights, f32 accumulation).  Split matmuls over
    # state / action are numerically identical to the concat([s, a]) matmul.
    h1 = (jnp.dot(s_ref[...], w1s_ref[...], preferred_element_type=jnp.float32)
          + jnp.dot(a_ref[...], w1a_ref[...], preferred_element_type=jnp.float32)
          + b1_ref[...])
    # Materialise the largest live intermediate explicitly in the fc2 compute
    # dtype (bf16 on the fast path): halves its VMEM / load-store footprint.
    h1 = jnp.maximum(h1, 0.0).astype(w2_ref.dtype)    # [tm, H1]

    # fc2 + ReLU (f32 accumulation on the MXU).
    h2 = (jnp.dot(h1, w2_ref[...], preferred_element_type=jnp.float32)
          + b2_ref[...])
    h2 = jnp.maximum(h2, 0.0)                          # [tm, H2] f32

    # fc3: N=1 output -> VPU multiply + lane reduction (skip the MXU).
    q = jnp.sum(h2 * w3_ref[...], axis=-1, keepdims=True) + b3_ref[...]
    o_ref[...] = q.astype(o_ref.dtype)                 # [tm, 1]


# -----------------------------------------------------------------------------
# One-time parameter preparation (keep per-call glue out of the forward path)
# -----------------------------------------------------------------------------
def prepare_params(params, state_dim, compute_dtype=jnp.bfloat16):
    """Pad fc1 width to a multiple of 128, split fc1's weight into state/action
    halves (f32), cast fc2's weight to compute_dtype, reshape biases to [1, N]
    rows and fc3's weight to a [1, H2] row."""
    w1, b1, w2, b2, w3, b3 = params
    h1 = w1.shape[1]                                   # 400
    h1_pad = ((h1 + 127) // 128) * 128                 # 512
    pad = h1_pad - h1

    w1p = jnp.pad(w1, ((0, 0), (0, pad))).astype(jnp.float32)     # [K, 512]
    w1s = w1p[:state_dim]                                         # [S, 512]
    w1a = w1p[state_dim:]                                         # [A, 512]
    b1p = jnp.pad(b1, (0, pad)).reshape(1, -1).astype(jnp.float32)
    w2p = jnp.pad(w2, ((0, pad), (0, 0))).astype(compute_dtype)   # [512, 256]
    b2p = b2.reshape(1, -1).astype(jnp.float32)
    w3r = w3.reshape(1, -1).astype(jnp.float32)                   # [1, 256]
    b3r = b3.reshape(1, 1).astype(jnp.float32)                    # [1, 1]
    return (w1s, w1a, b1p, w2p, b2p, w3r, b3r)


# -----------------------------------------------------------------------------
# Tiling heuristic (padding-aware; keeps >= 2 tiles for v7x megacore at big B)
# -----------------------------------------------------------------------------
def _choose_tiling(B, target_tile):
    n_tiles = pl.cdiv(B, target_tile)
    if B >= 512 and n_tiles < 2:
        n_tiles = 2                                    # feed both TCs on v7x
    tm = pl.cdiv(B, n_tiles)
    tm = ((tm + 7) // 8) * 8                           # sublane-align
    n_tiles = pl.cdiv(B, tm)
    return tm, n_tiles, n_tiles * tm


# -----------------------------------------------------------------------------
# Forward
# -----------------------------------------------------------------------------
@functools.partial(jax.jit, static_argnames=("target_tile",))
def critic_forward(state, action, prepped, *, target_tile=1024):
    """state: [B, state_dim] f32, action: [B, action_dim] f32 -> q: [B, 1] f32."""
    w1s, w1a, b1p, w2p, b2p, w3r, b3r = prepped
    B, S = state.shape
    A = action.shape[1]
    H1 = w1s.shape[1]
    H2 = w2p.shape[1]

    state = state.astype(jnp.float32)
    action = action.astype(jnp.float32)

    tm, n_tiles, Bp = _choose_tiling(B, target_tile)
    if Bp != B:
        state = jnp.pad(state, ((0, Bp - B), (0, 0)))
        action = jnp.pad(action, ((0, Bp - B), (0, 0)))

    # Weights/biases: whole-array blocks, constant index_map -> DMA'd once,
    # resident in VMEM across all grid steps.
    def resident(shape):
        return pl.BlockSpec(shape, lambda i: (0, 0))

    out = pl.pallas_call(
        critic_kernel,
        out_shape=jax.ShapeDtypeStruct((Bp, 1), jnp.float32),
        grid=(n_tiles,),
        in_specs=[
            pl.BlockSpec((tm, S), lambda i: (i, 0)),    # state (batch-tiled)
            pl.BlockSpec((tm, A), lambda i: (i, 0)),    # action (batch-tiled)
            resident((S, H1)),                          # w1_state
            resident((A, H1)),                          # w1_action
            resident((1, H1)),                          # b1
            resident((H1, H2)),                         # w2
            resident((1, H2)),                          # b2
            resident((1, H2)),                          # w3 (row)
            resident((1, 1)),                           # b3
        ],
        out_specs=pl.BlockSpec((tm, 1), lambda i: (i, 0)),
        compiler_params=pltpu.CompilerParams(
            dimension_semantics=("parallel",),          # megacore-shard batch
            vmem_limit_bytes=32 * 1024 * 1024,          # keep big tiles on v5e
        ),
    )(state, action, w1s, w1a, b1p, w2p, b2p, w3r, b3r)

    return out[:B]


# -----------------------------------------------------------------------------
# Init + pure-JAX reference
# -----------------------------------------------------------------------------
def init_params(key, state_dim, action_dim):
    """nn.Linear-style init: U(-1/sqrt(fan_in), 1/sqrt(fan_in))."""
    dims = [(state_dim + action_dim, 400), (400, 256), (256, 1)]
    params = []
    for fan_in, fan_out in dims:
        key, kw, kb = jax.random.split(key, 3)
        bound = 1.0 / jnp.sqrt(jnp.float32(fan_in))
        w = jax.random.uniform(kw, (fan_in, fan_out), jnp.float32, -bound, bound)
        b = jax.random.uniform(kb, (fan_out,), jnp.float32, -bound, bound)
        params.extend([w, b])
    return tuple(params)


def critic_reference(state, action, params):
    w1, b1, w2, b2, w3, b3 = params
    x = jnp.concatenate([state, action], axis=1)
    h1 = jnp.maximum(x @ w1 + b1, 0.0)
    h2 = jnp.maximum(h1 @ w2 + b2, 0.0)
    return h2 @ w3 + b3


# -----------------------------------------------------------------------------
# Smoke test
# -----------------------------------------------------------------------------
if __name__ == "__main__":
    key = jax.random.PRNGKey(0)
    state_dim, action_dim = 24, 8
    kp = jax.random.PRNGKey(0)
    params = init_params(kp, state_dim, action_dim)

    for B in (8, 13):   # 13 exercises sublane padding + slice-off path
        ks, ka = jax.random.split(jax.random.fold_in(key, B))
        state = jax.random.normal(ks, (B, state_dim), jnp.float32)
        action = jax.random.normal(ka, (B, action_dim), jnp.float32)

        q_ref = critic_reference(state, action, params)

        # Exact-math path (f32 weights) -- tight tolerance.
        prepped_f32 = prepare_params(params, state_dim, compute_dtype=jnp.float32)
        q_f32 = critic_forward(state, action, prepped_f32)
        jax.block_until_ready(q_f32)
        assert q_f32.shape == (B, 1), q_f32.shape
        assert jnp.allclose(q_f32, q_ref, atol=1e-4, rtol=1e-4), (q_f32, q_ref)

        # Fast path (bf16 fc2 weight / h1, f32 accumulation) -- loose tol.
        prepped_bf16 = prepare_params(params, state_dim, compute_dtype=jnp.bfloat16)
        q_bf16 = critic_forward(state, action, prepped_bf16)
        jax.block_until_ready(q_bf16)
        assert q_bf16.shape == (B, 1), q_bf16.shape
        assert jnp.allclose(q_bf16, q_ref, atol=5e-2, rtol=5e-2), (q_bf16, q_ref)

    print("KERNEL_OK")
</pallas_src>

<mosaic_0001>
module attributes {stable_mosaic.version = 11 : i64} {
  func.func @critic_kernel(%arg0: i32, %arg1: memref<8x24xf32, #tpu.memory_space<vmem>>, %arg2: memref<8x8xf32, #tpu.memory_space<vmem>>, %arg3: memref<24x512xf32, #tpu.memory_space<vmem>>, %arg4: memref<8x512xf32, #tpu.memory_space<vmem>>, %arg5: memref<1x512xf32, #tpu.memory_space<vmem>>, %arg6: memref<512x256xf32, #tpu.memory_space<vmem>>, %arg7: memref<1x256xf32, #tpu.memory_space<vmem>>, %arg8: memref<1x256xf32, #tpu.memory_space<vmem>>, %arg9: memref<1x1xf32, #tpu.memory_space<vmem>>, %arg10: memref<8x1xf32, #tpu.memory_space<vmem>>) attributes {dimension_semantics = [#tpu.dimension_semantics<parallel>], iteration_bounds = array<i64: 1>, scalar_prefetch = 0 : i64, scratch_operands = 0 : i64, tpu.core_type = #tpu.core_type<tc>, window_params = [{transform_indices = @transform_0, window_bounds = array<i64: 8, 24>}, {transform_indices = @transform_1, window_bounds = array<i64: 8, 8>}, {pipeline_mode = #tpu.pipeline_mode<synchronous>, transform_indices = @transform_2, window_bounds = array<i64: 24, 512>}, {pipeline_mode = #tpu.pipeline_mode<synchronous>, transform_indices = @transform_3, window_bounds = array<i64: 8, 512>}, {pipeline_mode = #tpu.pipeline_mode<synchronous>, transform_indices = @transform_4, window_bounds = array<i64: 1, 512>}, {pipeline_mode = #tpu.pipeline_mode<synchronous>, transform_indices = @transform_5, window_bounds = array<i64: 512, 256>}, {pipeline_mode = #tpu.pipeline_mode<synchronous>, transform_indices = @transform_6, window_bounds = array<i64: 1, 256>}, {pipeline_mode = #tpu.pipeline_mode<synchronous>, transform_indices = @transform_7, window_bounds = array<i64: 1, 256>}, {pipeline_mode = #tpu.pipeline_mode<synchronous>, transform_indices = @transform_8, window_bounds = array<i64: 1, 1>}, {transform_indices = @transform_9, window_bounds = array<i64: 8, 1>}]} {
    %c0 = arith.constant 0 : index
    %c0_0 = arith.constant 0 : index
    %0 = vector.load %arg1[%c0, %c0_0] : memref<8x24xf32, #tpu.memory_space<vmem>>, vector<8x24xf32>
    %c0_1 = arith.constant 0 : index
    %c0_2 = arith.constant 0 : index
    %1 = vector.load %arg3[%c0_1, %c0_2] : memref<24x512xf32, #tpu.memory_space<vmem>>, vector<24x512xf32>
    %cst = arith.constant dense<0.000000e+00> : vector<8x512xf32>
    %2 = tpu.matmul %0, %1, %cst {dimension_numbers = #tpu.dot_dimension_numbers<[1], [0], [0], [1], [0, 0, 1, 1], [], []>} : vector<8x24xf32>, vector<24x512xf32>, vector<8x512xf32> -> vector<8x512xf32>
    %c0_3 = arith.constant 0 : index
    %c0_4 = arith.constant 0 : index
    %3 = vector.load %arg2[%c0_3, %c0_4] : memref<8x8xf32, #tpu.memory_space<vmem>>, vector<8x8xf32>
    %c0_5 = arith.constant 0 : index
    %c0_6 = arith.constant 0 : index
    %4 = vector.load %arg4[%c0_5, %c0_6] : memref<8x512xf32, #tpu.memory_space<vmem>>, vector<8x512xf32>
    %cst_7 = arith.constant dense<0.000000e+00> : vector<8x512xf32>
    %5 = tpu.matmul %3, %4, %cst_7 {dimension_numbers = #tpu.dot_dimension_numbers<[1], [0], [0], [1], [0, 0, 1, 1], [], []>} : vector<8x8xf32>, vector<8x512xf32>, vector<8x512xf32> -> vector<8x512xf32>
    %6 = arith.addf %2, %5 : vector<8x512xf32>
    %c0_8 = arith.constant 0 : index
    %c0_9 = arith.constant 0 : index
    %7 = vector.load %arg5[%c0_8, %c0_9] : memref<1x512xf32, #tpu.memory_space<vmem>>, vector<1x512xf32>
    %8 = vector.broadcast %7 : vector<1x512xf32> to vector<8x512xf32>
    %9 = arith.addf %6, %8 : vector<8x512xf32>
    %cst_10 = arith.constant 0.000000e+00 : f32
    %10 = vector.broadcast %cst_10 : f32 to vector<8x512xf32>
    %11 = arith.maximumf %9, %10 : vector<8x512xf32>
    %c0_11 = arith.constant 0 : index
    %c0_12 = arith.constant 0 : index
    %12 = vector.load %arg6[%c0_11, %c0_12] : memref<512x256xf32, #tpu.memory_space<vmem>>, vector<512x256xf32>
    %cst_13 = arith.constant dense<0.000000e+00> : vector<8x256xf32>
    %13 = tpu.matmul %11, %12, %cst_13 {dimension_numbers = #tpu.dot_dimension_numbers<[1], [0], [0], [1], [0, 0, 1, 1], [], []>} : vector<8x512xf32>, vector<512x256xf32>, vector<8x256xf32> -> vector<8x256xf32>
    %c0_14 = arith.constant 0 : index
    %c0_15 = arith.constant 0 : index
    %14 = vector.load %arg7[%c0_14, %c0_15] : memref<1x256xf32, #tpu.memory_space<vmem>>, vector<1x256xf32>
    %15 = vector.broadcast %14 : vector<1x256xf32> to vector<8x256xf32>
    %16 = arith.addf %13, %15 : vector<8x256xf32>
    %cst_16 = arith.constant 0.000000e+00 : f32
    %17 = vector.broadcast %cst_16 : f32 to vector<8x256xf32>
    %18 = arith.maximumf %16, %17 : vector<8x256xf32>
    %c0_17 = arith.constant 0 : index
    %c0_18 = arith.constant 0 : index
    %19 = vector.load %arg8[%c0_17, %c0_18] : memref<1x256xf32, #tpu.memory_space<vmem>>, vector<1x256xf32>
    %20 = vector.broadcast %19 : vector<1x256xf32> to vector<8x256xf32>
    %21 = arith.mulf %18, %20 : vector<8x256xf32>
    %cst_19 = arith.constant dense<0.000000e+00> : vector<8xf32>
    %22 = vector.multi_reduction <add>, %21, %cst_19 [1] : vector<8x256xf32> to vector<8xf32>
    %23 = vector.shape_cast %22 : vector<8xf32> to vector<8x1xf32>
    %c0_20 = arith.constant 0 : index
    %c0_21 = arith.constant 0 : index
    %24 = vector.load %arg9[%c0_20, %c0_21] : memref<1x1xf32, #tpu.memory_space<vmem>>, vector<1x1xf32>
    %25 = vector.broadcast %24 : vector<1x1xf32> to vector<8x1xf32>
    %26 = arith.addf %23, %25 : vector<8x1xf32>
    %c0_22 = arith.constant 0 : index
    %c0_23 = arith.constant 0 : index
    %27 = vector.load %arg10[%c0_22, %c0_23] : memref<8x1xf32, #tpu.memory_space<vmem>>, vector<8x1xf32>
    tpu.vector_store %arg10[%c0_22, %c0_23], %26 {strides = array<i32>} : memref<8x1xf32, #tpu.memory_space<vmem>>, vector<8x1xf32>,
    return
  }
  func.func @transform_0(%arg0: i32) -> (i32, i32) {
    %c0_i32 = arith.constant 0 : i32
    %c0_i32_0 = arith.constant 0 : i32
    return %arg0, %c0_i32 : i32, i32
  }
  func.func @transform_1(%arg0: i32) -> (i32, i32) {
    %c0_i32 = arith.constant 0 : i32
    %c0_i32_0 = arith.constant 0 : i32
    return %arg0, %c0_i32 : i32, i32
  }
  func.func @transform_2(%arg0: i32) -> (i32, i32) {
    %c0_i32 = arith.constant 0 : i32
    %c0_i32_0 = arith.constant 0 : i32
    %c0_i32_1 = arith.constant 0 : i32
    return %c0_i32, %c0_i32_0 : i32, i32
  }
  func.func @transform_3(%arg0: i32) -> (i32, i32) {
    %c0_i32 = arith.constant 0 : i32
    %c0_i32_0 = arith.constant 0 : i32
    %c0_i32_1 = arith.constant 0 : i32
    return %c0_i32, %c0_i32_0 : i32, i32
  }
  func.func @transform_4(%arg0: i32) -> (i32, i32) {
    %c0_i32 = arith.constant 0 : i32
    %c0_i32_0 = arith.constant 0 : i32
    %c0_i32_1 = arith.constant 0 : i32
    return %c0_i32, %c0_i32_0 : i32, i32
  }
  func.func @transform_5(%arg0: i32) -> (i32, i32) {
    %c0_i32 = arith.constant 0 : i32
    %c0_i32_0 = arith.constant 0 : i32
    %c0_i32_1 = arith.constant 0 : i32
    return %c0_i32, %c0_i32_0 : i32, i32
  }
  func.func @transform_6(%arg0: i32) -> (i32, i32) {
    %c0_i32 = arith.constant 0 : i32
    %c0_i32_0 = arith.constant 0 : i32
    %c0_i32_1 = arith.constant 0 : i32
    return %c0_i32, %c0_i32_0 : i32, i32
  }
  func.func @transform_7(%arg0: i32) -> (i32, i32) {
    %c0_i32 = arith.constant 0 : i32
    %c0_i32_0 = arith.constant 0 : i32
    %c0_i32_1 = arith.constant 0 : i32
    return %c0_i32, %c0_i32_0 : i32, i32
  }
  func.func @transform_8(%arg0: i32) -> (i32, i32) {
    %c0_i32 = arith.constant 0 : i32
    %c0_i32_0 = arith.constant 0 : i32
    %c0_i32_1 = arith.constant 0 : i32
    return %c0_i32, %c0_i32_0 : i32, i32
  }
  func.func @transform_9(%arg0: i32) -> (i32, i32) {
    %c0_i32 = arith.constant 0 : i32
    %c0_i32_0 = arith.constant 0 : i32
    return %arg0, %c0_i32 : i32, i32
  }
}

</mosaic_0001>

<llo_original>
// kernel: critic_forward.1
$region0: #{critic_forward.1}
  #allocation0 [shape = 'u32[]', space=smem, size = 0x4, offset = 0x4, fixed_abs, tag = 'smem constant byte address 0x4 - core index']
  #allocation1 [shape = 'u32[72,128]{1,0:T(1,128)}', space=vmem, size = 0x9000, scoped, tag = 'internal scratch']
  #allocation2 [shape = 'f32[1,1]{1,0:T(1,128)S(1)}', space=vmem, size = 0x200, scoped, tag = 'scoped memory for critic_forward.1']
  %s0 = inlined_call_operand.hbm [shape: f32[8,24], index: 0, kind: input, shape index: {}]
  %s1 = inlined_call_operand.hbm [shape: f32[8,8], index: 1, kind: input, shape index: {}]
  %s2 = inlined_call_operand.hbm [shape: f32[24,512], index: 2, kind: input, shape index: {}]
  %s3 = inlined_call_operand.hbm [shape: f32[8,512], index: 3, kind: input, shape index: {}]
  %s4 = inlined_call_operand.vmem [shape: f32[1,512], index: 4, kind: input, shape index: {}]
  %s5 = inlined_call_operand.hbm [shape: f32[512,256], index: 5, kind: input, shape index: {}]
  %s6 = inlined_call_operand.vmem [shape: f32[1,256], index: 6, kind: input, shape index: {}]
  %s7 = inlined_call_operand.vmem [shape: f32[1,256], index: 7, kind: input, shape index: {}]
  %s8 = inlined_call_operand.<no memory space> [shape: f32[1,1], index: 8, kind: input, shape index: {}]
  %s9 = inlined_call_operand.vmem [shape: f32[8,1], index: 9, kind: output, shape index: {}]
  %s10 = sld [smem:[#allocation0]]
  $region66: #{critic_forward.1} parent=0
    _
  %s12 = ssub.s32 1, %s10
  %s13 = scalar_select 0, %s12, %s10
  %v14 = vstv %s8
  %15 = vst [vmem:[#allocation2] sm:$0x1] %v14
  $region1: #{critic_forward.1} parent=0
    #allocation3 [shape = 'u8[4096]{0}', space=vmem, size = 0x1000, scoped, tag = 'input window, operand 0, single buffered']
    #allocation4 [shape = 's32[1]{0}', space=sflag, size = 0x4, scoped, tag = 'scoped memory for critic_forward.1']
    #allocation5 [shape = 'u8[4096]{0}', space=vmem, size = 0x1000, scoped, tag = 'input window, operand 1, single buffered']
    #allocation6 [shape = 's32[1]{0}', space=sflag, size = 0x4, scoped, tag = 'scoped memory for critic_forward.1']
    #allocation7 [shape = 'u8[49152]{0}', space=vmem, size = 0xc000, scoped, tag = 'input window, operand 2, single buffered']
    #allocation8 [shape = 'u8[16384]{0}', space=vmem, size = 0x4000, scoped, tag = 'input window, operand 3, single buffered']
    #allocation9 [shape = 's32[1]{0}', space=sflag, size = 0x4, scoped, tag = 'scoped memory for critic_forward.1']
    #allocation10 [shape = 'u8[524288]{0}', space=vmem, size = 0x80000, scoped, tag = 'input window, operand 5, single buffered']
    %16 = vsyncpa [#allocation4], 0
    %17 = vsyncpa [#allocation6], 0
    %18 = vsyncpa [#allocation9], 0
    // Predicated region
    $region2: #{critic_forward.1} parent=1 // pred_check
      _
    $region3: #{critic_forward.1} parent=1 // pred_check_branch
      %20 = sbr.rel (0) target = $region5
    $region4: #{critic_forward.1} parent=1 // pred_region
      %22 = vsyncadd [#allocation4], 0
      %s24 = sshll.u32 %s0, 4
      %s25 = int_to_ptr.hbm [resolvable:$true] %s24
      %s26 = sshll.u32 [#allocation3], 4
      %s27 = int_to_ptr.vmem [resolvable:$true] %s26
      %29 = dma.hbm_to_vmem [thread:$0]  %s25, 128, %s27, [#allocation4]
    $region5: #{critic_forward.1} parent=1 // pred_fallthru
      _
    // Predicated region
    $region6: #{critic_forward.1} parent=1 // pred_check
      _
    $region7: #{critic_forward.1} parent=1 // pred_check_branch
      %31 = sbr.rel (0) target = $region9
    $region8: #{critic_forward.1} parent=1 // pred_region
      %33 = vsyncadd [#allocation6], 0
      %s35 = sshll.u32 %s1, 4
      %s36 = int_to_ptr.hbm [resolvable:$true] %s35
      %s37 = sshll.u32 [#allocation5], 4
      %s38 = int_to_ptr.vmem [resolvable:$true] %s37
      %40 = dma.hbm_to_vmem [thread:$0]  %s36, 128, %s38, [#allocation6]
    $region9: #{critic_forward.1} parent=1 // pred_fallthru
      _
    // Predicated region
    $region10: #{critic_forward.1} parent=1 // pred_check
      _
    $region11: #{critic_forward.1} parent=1 // pred_check_branch
      %42 = sbr.rel (0) target = $region13
    $region12: #{critic_forward.1} parent=1 // pred_region
      %44 = vsyncadd [#allocation6], 0
      %s45 = sshll.u32 %s2, 4
      %s46 = int_to_ptr.hbm [resolvable:$true] %s45
      %s47 = sshll.u32 [#allocation7], 4
      %s48 = int_to_ptr.vmem [resolvable:$true] %s47
      %53 = dma.hbm_to_vmem [thread:$0]  %s46, 1536, %s48, [#allocation6], 512, 512, 32
    $region13: #{critic_forward.1} parent=1 // pred_fallthru
      _
    // Predicated region
    $region14: #{critic_forward.1} parent=1 // pred_check
      _
    $region15: #{critic_forward.1} parent=1 // pred_check_branch
      %55 = sbr.rel (0) target = $region17
    $region16: #{critic_forward.1} parent=1 // pred_region
      %57 = vsyncadd [#allocation9], 0
      %s59 = sshll.u32 %s3, 4
      %s60 = int_to_ptr.hbm [resolvable:$true] %s59
      %s61 = sshll.u32 [#allocation8], 4
      %s62 = int_to_ptr.vmem [resolvable:$true] %s61
      %64 = dma.hbm_to_vmem [thread:$0]  %s60, 512, %s62, [#allocation9]
    $region17: #{critic_forward.1} parent=1 // pred_fallthru
      _
    // Predicated region
    $region18: #{critic_forward.1} parent=1 // pred_check
      _
    $region19: #{critic_forward.1} parent=1 // pred_check_branch
      %66 = sbr.rel (0) target = $region21
    $region20: #{critic_forward.1} parent=1 // pred_region
      _
    $region21: #{critic_forward.1} parent=1 // pred_fallthru
      _
    // Predicated region
    $region22: #{critic_forward.1} parent=1 // pred_check
      _
    $region23: #{critic_forward.1} parent=1 // pred_check_branch
      %68 = sbr.rel (0) target = $region25
    $region24: #{critic_forward.1} parent=1 // pred_region
      %70 = vsyncadd [#allocation9], 0
      %s71 = sshll.u32 %s5, 4
      %s72 = int_to_ptr.hbm [resolvable:$true] %s71
      %s73 = sshll.u32 [#allocation10], 4
      %s74 = int_to_ptr.vmem [resolvable:$true] %s73
      %79 = dma.hbm_to_vmem [thread:$0]  %s72, 16384, %s74, [#allocation9], 256, 256, 16
    $region25: #{critic_forward.1} parent=1 // pred_fallthru
      _
    // Predicated region
    $region26: #{critic_forward.1} parent=1 // pred_check
      _
    $region27: #{critic_forward.1} parent=1 // pred_check_branch
      %81 = sbr.rel (0) target = $region29
    $region28: #{critic_forward.1} parent=1 // pred_region
      _
    $region29: #{critic_forward.1} parent=1 // pred_fallthru
      _
    // Predicated region
    $region30: #{critic_forward.1} parent=1 // pred_check
      _
    $region31: #{critic_forward.1} parent=1 // pred_check_branch
      %83 = sbr.rel (0) target = $region33
    $region32: #{critic_forward.1} parent=1 // pred_region
      _
    $region33: #{critic_forward.1} parent=1 // pred_fallthru
      _
    // Predicated region
    $region34: #{critic_forward.1} parent=1 // pred_check
      _
    $region35: #{critic_forward.1} parent=1 // pred_check_branch
      %85 = sbr.rel (0) target = $region37
    $region36: #{critic_forward.1} parent=1 // pred_region
      _
    $region37: #{critic_forward.1} parent=1 // pred_fallthru
      _
    // Predicated region
    $region38: #{critic_forward.1} parent=1 // pred_check
      _
    $region39: #{critic_forward.1} parent=1 // pred_check_branch
      %87 = sbr.rel (0) target = $region41
    $region40: #{critic_forward.1} parent=1 // pred_region
      %89 = dma.done [#allocation4], 128
    $region41: #{critic_forward.1} parent=1 // pred_fallthru
      _
    // Predicated region
    $region42: #{critic_forward.1} parent=1 // pred_check
      _
    $region43: #{critic_forward.1} parent=1 // pred_check_branch
      %91 = sbr.rel (0) target = $region45
    $region44: #{critic_forward.1} parent=1 // pred_region
      %93 = dma.done [#allocation6], 128
    $region45: #{critic_forward.1} parent=1 // pred_fallthru
      _
    // Predicated region
    $region46: #{critic_forward.1} parent=1 // pred_check
      _
    $region47: #{critic_forward.1} parent=1 // pred_check_branch
      %95 = sbr.rel (0) target = $region49
    $region48: #{critic_forward.1} parent=1 // pred_region
      %97 = dma.done [#allocation6], 1536
    $region49: #{critic_forward.1} parent=1 // pred_fallthru
      _
    // Predicated region
    $region50: #{critic_forward.1} parent=1 // pred_check
      _
    $region51: #{critic_forward.1} parent=1 // pred_check_branch
      %99 = sbr.rel (0) target = $region53
    $region52: #{critic_forward.1} parent=1 // pred_region
      %101 = dma.done [#allocation9], 512
    $region53: #{critic_forward.1} parent=1 // pred_fallthru
      _
    // Predicated region
    $region54: #{critic_forward.1} parent=1 // pred_check
      _
    $region55: #{critic_forward.1} parent=1 // pred_check_branch
      %103 = sbr.rel (0) target = $region57
    $region56: #{critic_forward.1} parent=1 // pred_region
      %105 = dma.done [#allocation9], 16384
    $region57: #{critic_forward.1} parent=1 // pred_fallthru
      _
    %v106 = vld [vmem:[#allocation3] sm:$0xff]
    %v107 = vld [vmem:[#allocation7] sm:$0xff]
    %v108 = vld [vmem:[#allocation7 + $0x8] sm:$0xff]
    %v109 = vld [vmem:[#allocation7 + $0x10] sm:$0xff]
    %v110 = vld [vmem:[#allocation7 + $0x18] sm:$0xff]
    %v111 = vld [vmem:[#allocation7 + $0x20] sm:$0xff]
    %v112 = vld [vmem:[#allocation7 + $0x28] sm:$0xff]
    %v113 = vld [vmem:[#allocation7 + $0x30] sm:$0xff]
    %v114 = vld [vmem:[#allocation7 + $0x38] sm:$0xff]
    %v115 = vld [vmem:[#allocation7 + $0x40] sm:$0xff]
    %v116 = vld [vmem:[#allocation7 + $0x48] sm:$0xff]
    %v117 = vld [vmem:[#allocation7 + $0x50] sm:$0xff]
    %v118 = vld [vmem:[#allocation7 + $0x58] sm:$0xff]
    %v119 = vld [vmem:[#allocation5] sm:$0xff]
    %v120 = vld [vmem:[#allocation8] sm:$0xff]
    %v121 = vld [vmem:[#allocation8 + $0x8] sm:$0xff]
    %v122 = vld [vmem:[#allocation8 + $0x10] sm:$0xff]
    %v123 = vld [vmem:[#allocation8 + $0x18] sm:$0xff]
    %vm124 = vcmask 64512
    %v126 = vsel %vm124, %v119, 0
    %128 = vmatpush.msra.mxu0 0.0
    %129 = vmatpush.msra.mxu0 0.0
    %130 = vmatpush.msra.mxu0 0.0
    %131 = vmatpush.msra.mxu0 0.0
    %132 = vmatpush.msra.mxu0 0.0
    %133 = vmatpush.msra.mxu0 0.0
    %134 = vmatpush.msra.mxu0 0.0
    %135 = vmatpush.msra.mxu0 0.0
    %136 = vmatpush.msra.mxu0 0.0
    %137 = vmatpush.msra.mxu0 0.0
    %138 = vmatpush.msra.mxu0 0.0
    %139 = vmatpush.msra.mxu0 0.0
    %140 = vmatpush.msra.mxu0 0.0
    %141 = vmatpush.msra.mxu0 0.0
    %142 = vmatpush.msra.mxu0 0.0
    %143 = vmatpush.msra.mxu0 %v120
    %144 = vmatmul.f32.gmra.mxu0 %v126
    %v145 = vpop.f32.mrf.mxu0
    %v146 = vadd.f32 0.0, %v145
    %147 = vdwg.mxu0
    %148 = vmatpush.msra.mxu0 0.0
    %149 = vmatpush.msra.mxu0 0.0
    %150 = vmatpush.msra.mxu0 0.0
    %151 = vmatpush.msra.mxu0 0.0
    %152 = vmatpush.msra.mxu0 0.0
    %153 = vmatpush.msra.mxu0 0.0
    %154 = vmatpush.msra.mxu0 0.0
    %155 = vmatpush.msra.mxu0 0.0
    %156 = vmatpush.msra.mxu0 0.0
    %157 = vmatpush.msra.mxu0 0.0
    %158 = vmatpush.msra.mxu0 0.0
    %159 = vmatpush.msra.mxu0 0.0
    %160 = vmatpush.msra.mxu0 0.0
    %161 = vmatpush.msra.mxu0 0.0
    %162 = vmatpush.msra.mxu0 0.0
    %163 = vmatpush.msra.mxu0 %v121
    %164 = vmatmul.f32.gmra.mxu0 %v126
    %v165 = vpop.f32.mrf.mxu0
    %v166 = vadd.f32 0.0, %v165
    %167 = vdwg.mxu0
    %168 = vmatpush.msra.mxu0 0.0
    %169 = vmatpush.msra.mxu0 0.0
    %170 = vmatpush.msra.mxu0 0.0
    %171 = vmatpush.msra.mxu0 0.0
    %172 = vmatpush.msra.mxu0 0.0
    %173 = vmatpush.msra.mxu0 0.0
    %174 = vmatpush.msra.mxu0 0.0
    %175 = vmatpush.msra.mxu0 0.0
    %176 = vmatpush.msra.mxu0 0.0
    %177 = vmatpush.msra.mxu0 0.0
    %178 = vmatpush.msra.mxu0 0.0
    %179 = vmatpush.msra.mxu0 0.0
    %180 = vmatpush.msra.mxu0 0.0
    %181 = vmatpush.msra.mxu0 0.0
    %182 = vmatpush.msra.mxu0 0.0
    %183 = vmatpush.msra.mxu0 %v122
    %184 = vmatmul.f32.gmra.mxu0 %v126
    %v185 = vpop.f32.mrf.mxu0
    %v186 = vadd.f32 0.0, %v185
    %187 = vdwg.mxu0
    %188 = vmatpush.msra.mxu0 0.0
    %189 = vmatpush.msra.mxu0 0.0
    %190 = vmatpush.msra.mxu0 0.0
    %191 = vmatpush.msra.mxu0 0.0
    %192 = vmatpush.msra.mxu0 0.0
    %193 = vmatpush.msra.mxu0 0.0
    %194 = vmatpush.msra.mxu0 0.0
    %195 = vmatpush.msra.mxu0 0.0
    %196 = vmatpush.msra.mxu0 0.0
    %197 = vmatpush.msra.mxu0 0.0
    %198 = vmatpush.msra.mxu0 0.0
    %199 = vmatpush.msra.mxu0 0.0
    %200 = vmatpush.msra.mxu0 0.0
    %201 = vmatpush.msra.mxu0 0.0
    %202 = vmatpush.msra.mxu0 0.0
    %203 = vmatpush.msra.mxu0 %v123
    %204 = vmatmul.f32.gmra.mxu0 %v126
    %v205 = vpop.f32.mrf.mxu0
    %v206 = vadd.f32 0.0, %v205
    %207 = vdwg.mxu0
    %vm208 = vcmask 195584
    %v210 = vsel %vm208, %v106, 0
    %212 = vmatpush.msra.mxu0 0.0
    %213 = vmatpush.msra.mxu0 0.0
    %214 = vmatpush.msra.mxu0 0.0
    %215 = vmatpush.msra.mxu0 0.0
    %216 = vmatpush.msra.mxu0 0.0
    %217 = vmatpush.msra.mxu0 0.0
    %218 = vmatpush.msra.mxu0 0.0
    %219 = vmatpush.msra.mxu0 0.0
    %220 = vmatpush.msra.mxu0 0.0
    %221 = vmatpush.msra.mxu0 0.0
    %222 = vmatpush.msra.mxu0 0.0
    %223 = vmatpush.msra.mxu0 0.0
    %224 = vmatpush.msra.mxu0 0.0
    %225 = vmatpush.msra.mxu0 %v115
    %226 = vmatpush.msra.mxu0 %v111
    %227 = vmatpush.msra.mxu0 %v107
    %228 = vmatmul.f32.gmra.mxu0 %v210
    %v229 = vpop.f32.mrf.mxu0
    %v230 = vadd.f32 %v146, %v229
    %231 = vdwg.mxu0
    %232 = vmatpush.msra.mxu0 0.0
    %233 = vmatpush.msra.mxu0 0.0
    %234 = vmatpush.msra.mxu0 0.0
    %235 = vmatpush.msra.mxu0 0.0
    %236 = vmatpush.msra.mxu0 0.0
    %237 = vmatpush.msra.mxu0 0.0
    %238 = vmatpush.msra.mxu0 0.0
    %239 = vmatpush.msra.mxu0 0.0
    %240 = vmatpush.msra.mxu0 0.0
    %241 = vmatpush.msra.mxu0 0.0
    %242 = vmatpush.msra.mxu0 0.0
    %243 = vmatpush.msra.mxu0 0.0
    %244 = vmatpush.msra.mxu0 0.0
    %245 = vmatpush.msra.mxu0 %v116
    %246 = vmatpush.msra.mxu0 %v112
    %247 = vmatpush.msra.mxu0 %v108
    %248 = vmatmul.f32.gmra.mxu0 %v210
    %v249 = vpop.f32.mrf.mxu0
    %v250 = vadd.f32 %v166, %v249
    %251 = vdwg.mxu0
    %252 = vmatpush.msra.mxu0 0.0
    %253 = vmatpush.msra.mxu0 0.0
    %254 = vmatpush.msra.mxu0 0.0
    %255 = vmatpush.msra.mxu0 0.0
    %256 = vmatpush.msra.mxu0 0.0
    %257 = vmatpush.msra.mxu0 0.0
    %258 = vmatpush.msra.mxu0 0.0
    %259 = vmatpush.msra.mxu0 0.0
    %260 = vmatpush.msra.mxu0 0.0
    %261 = vmatpush.msra.mxu0 0.0
    %262 = vmatpush.msra.mxu0 0.0
    %263 = vmatpush.msra.mxu0 0.0
    %264 = vmatpush.msra.mxu0 0.0
    %265 = vmatpush.msra.mxu0 %v117
    %266 = vmatpush.msra.mxu0 %v113
    %267 = vmatpush.msra.mxu0 %v109
    %268 = vmatmul.f32.gmra.mxu0 %v210
    %v269 = vpop.f32.mrf.mxu0
    %v270 = vadd.f32 %v186, %v269
    %271 = vdwg.mxu0
    %272 = vmatpush.msra.mxu0 0.0
    %273 = vmatpush.msra.mxu0 0.0
    %274 = vmatpush.msra.mxu0 0.0
    %275 = vmatpush.msra.mxu0 0.0
    %276 = vmatpush.msra.mxu0 0.0
    %277 = vmatpush.msra.mxu0 0.0
    %278 = vmatpush.msra.mxu0 0.0
    %279 = vmatpush.msra.mxu0 0.0
    %280 = vmatpush.msra.mxu0 0.0
    %281 = vmatpush.msra.mxu0 0.0
    %282 = vmatpush.msra.mxu0 0.0
    %283 = vmatpush.msra.mxu0 0.0
    %284 = vmatpush.msra.mxu0 0.0
    %285 = vmatpush.msra.mxu0 %v118
    %286 = vmatpush.msra.mxu0 %v114
    %287 = vmatpush.msra.mxu0 %v110
    %288 = vmatmul.f32.gmra.mxu0 %v210
    %v289 = vpop.f32.mrf.mxu0
    %v290 = vadd.f32 %v206, %v289
    %291 = vdwg.mxu0
    %v292 = vld [vmem:[%s4] sm:$0xf]
    %v294 = vperm.slane %v292, 0
    %v295 = vperm.slane %v292, 1
    %v296 = vperm.slane %v292, 2
    %v297 = vperm.slane %v292, 3
    %v302 = vadd.f32 %v230, %v294
    %v303 = vadd.f32 %v250, %v295
    %v304 = vadd.f32 %v270, %v296
    %v305 = vadd.f32 %v290, %v297
    %v306 = vmax.f32 %v302, 0.0
    %v307 = vmax.f32 %v303, 0.0
    %v308 = vmax.f32 %v304, 0.0
    %v309 = vmax.f32 %v305, 0.0
    %v310 = vld [vmem:[#allocation10] sm:$0xff]
    %v311 = vld [vmem:[#allocation10 + $0x8] sm:$0xff]
    %v312 = vld [vmem:[#allocation10 + $0x10] sm:$0xff]
    %v313 = vld [vmem:[#allocation10 + $0x18] sm:$0xff]
    %v314 = vld [vmem:[#allocation10 + $0x20] sm:$0xff]
    %v315 = vld [vmem:[#allocation10 + $0x28] sm:$0xff]
    %v316 = vld [vmem:[#allocation10 + $0x30] sm:$0xff]
    %v317 = vld [vmem:[#allocation10 + $0x38] sm:$0xff]
    %v318 = vld [vmem:[#allocation10 + $0x40] sm:$0xff]
    %v319 = vld [vmem:[#allocation10 + $0x48] sm:$0xff]
    %v320 = vld [vmem:[#allocation10 + $0x50] sm:$0xff]
    %v321 = vld [vmem:[#allocation10 + $0x58] sm:$0xff]
    %v322 = vld [vmem:[#allocation10 + $0x60] sm:$0xff]
    %v323 = vld [vmem:[#allocation10 + $0x68] sm:$0xff]
    %v324 = vld [vmem:[#allocation10 + $0x70] sm:$0xff]
    %v325 = vld [vmem:[#allocation10 + $0x78] sm:$0xff]
    %v326 = vld [vmem:[#allocation10 + $0x80] sm:$0xff]
    %v327 = vld [vmem:[#allocation10 + $0x88] sm:$0xff]
    %v328 = vld [vmem:[#allocation10 + $0x90] sm:$0xff]
    %v329 = vld [vmem:[#allocation10 + $0x98] sm:$0xff]
    %v330 = vld [vmem:[#allocation10 + $0xa0] sm:$0xff]
    %v331 = vld [vmem:[#allocation10 + $0xa8] sm:$0xff]
    %v332 = vld [vmem:[#allocation10 + $0xb0] sm:$0xff]
    %v333 = vld [vmem:[#allocation10 + $0xb8] sm:$0xff]
    %v334 = vld [vmem:[#allocation10 + $0xc0] sm:$0xff]
    %v335 = vld [vmem:[#allocation10 + $0xc8] sm:$0xff]
    %v336 = vld [vmem:[#allocation10 + $0xd0] sm:$0xff]
    %v337 = vld [vmem:[#allocation10 + $0xd8] sm:$0xff]
    %v338 = vld [vmem:[#allocation10 + $0xe0] sm:$0xff]
    %v339 = vld [vmem:[#allocation10 + $0xe8] sm:$0xff]
    %v340 = vld [vmem:[#allocation10 + $0xf0] sm:$0xff]
    %v341 = vld [vmem:[#allocation10 + $0xf8] sm:$0xff]
    %v342 = vld [vmem:[#allocation10 + $0x100] sm:$0xff]
    %v343 = vld [vmem:[#allocation10 + $0x108] sm:$0xff]
    %v344 = vld [vmem:[#allocation10 + $0x110] sm:$0xff]
    %v345 = vld [vmem:[#allocation10 + $0x118] sm:$0xff]
    %v346 = vld [vmem:[#allocation10 + $0x120] sm:$0xff]
    %v347 = vld [vmem:[#allocation10 + $0x128] sm:$0xff]
    %v348 = vld [vmem:[#allocation10 + $0x130] sm:$0xff]
    %v349 = vld [vmem:[#allocation10 + $0x138] sm:$0xff]
    %v350 = vld [vmem:[#allocation10 + $0x140] sm:$0xff]
    %v351 = vld [vmem:[#allocation10 + $0x148] sm:$0xff]
    %v352 = vld [vmem:[#allocation10 + $0x150] sm:$0xff]
    %v353 = vld [vmem:[#allocation10 + $0x158] sm:$0xff]
    %v354 = vld [vmem:[#allocation10 + $0x160] sm:$0xff]
    %v355 = vld [vmem:[#allocation10 + $0x168] sm:$0xff]
    %v356 = vld [vmem:[#allocation10 + $0x170] sm:$0xff]
    %v357 = vld [vmem:[#allocation10 + $0x178] sm:$0xff]
    %v358 = vld [vmem:[#allocation10 + $0x180] sm:$0xff]
    %v359 = vld [vmem:[#allocation10 + $0x188] sm:$0xff]
    %v360 = vld [vmem:[#allocation10 + $0x190] sm:$0xff]
    %v361 = vld [vmem:[#allocation10 + $0x198] sm:$0xff]
    %v362 = vld [vmem:[#allocation10 + $0x1a0] sm:$0xff]
    %v363 = vld [vmem:[#allocation10 + $0x1a8] sm:$0xff]
    %v364 = vld [vmem:[#allocation10 + $0x1b0] sm:$0xff]
    %v365 = vld [vmem:[#allocation10 + $0x1b8] sm:$0xff]
    %v366 = vld [vmem:[#allocation10 + $0x1c0] sm:$0xff]
    %v367 = vld [vmem:[#allocation10 + $0x1c8] sm:$0xff]
    %v368 = vld [vmem:[#allocation10 + $0x1d0] sm:$0xff]
    %v369 = vld [vmem:[#allocation10 + $0x1d8] sm:$0xff]
    %v370 = vld [vmem:[#allocation10 + $0x1e0] sm:$0xff]
    %v371 = vld [vmem:[#allocation10 + $0x1e8] sm:$0xff]
    %v372 = vld [vmem:[#allocation10 + $0x1f0] sm:$0xff]
    %v373 = vld [vmem:[#allocation10 + $0x1f8] sm:$0xff]
    %v374 = vld [vmem:[#allocation10 + $0x200] sm:$0xff]
    %v375 = vld [vmem:[#allocation10 + $0x208] sm:$0xff]
    %v376 = vld [vmem:[#allocation10 + $0x210] sm:$0xff]
    %v377 = vld [vmem:[#allocation10 + $0x218] sm:$0xff]
    %v378 = vld [vmem:[#allocation10 + $0x220] sm:$0xff]
    %v379 = vld [vmem:[#allocation10 + $0x228] sm:$0xff]
    %v380 = vld [vmem:[#allocation10 + $0x230] sm:$0xff]
    %v381 = vld [vmem:[#allocation10 + $0x238] sm:$0xff]
    %v382 = vld [vmem:[#allocation10 + $0x240] sm:$0xff]
    %v383 = vld [vmem:[#allocation10 + $0x248] sm:$0xff]
    %v384 = vld [vmem:[#allocation10 + $0x250] sm:$0xff]
    %v385 = vld [vmem:[#allocation10 + $0x258] sm:$0xff]
    %v386 = vld [vmem:[#allocation10 + $0x260] sm:$0xff]
    %v387 = vld [vmem:[#allocation10 + $0x268] sm:$0xff]
    %v388 = vld [vmem:[#allocation10 + $0x270] sm:$0xff]
    %v389 = vld [vmem:[#allocation10 + $0x278] sm:$0xff]
    %v390 = vld [vmem:[#allocation10 + $0x280] sm:$0xff]
    %v391 = vld [vmem:[#allocation10 + $0x288] sm:$0xff]
    %v392 = vld [vmem:[#allocation10 + $0x290] sm:$0xff]
    %v393 = vld [vmem:[#allocation10 + $0x298] sm:$0xff]
    %v394 = vld [vmem:[#allocation10 + $0x2a0] sm:$0xff]
    %v395 = vld [vmem:[#allocation10 + $0x2a8] sm:$0xff]
    %v396 = vld [vmem:[#allocation10 + $0x2b0] sm:$0xff]
    %v397 = vld [vmem:[#allocation10 + $0x2b8] sm:$0xff]
    %v398 = vld [vmem:[#allocation10 + $0x2c0] sm:$0xff]
    %v399 = vld [vmem:[#allocation10 + $0x2c8] sm:$0xff]
    %v400 = vld [vmem:[#allocation10 + $0x2d0] sm:$0xff]
    %v401 = vld [vmem:[#allocation10 + $0x2d8] sm:$0xff]
    %v402 = vld [vmem:[#allocation10 + $0x2e0] sm:$0xff]
    %v403 = vld [vmem:[#allocation10 + $0x2e8] sm:$0xff]
    %v404 = vld [vmem:[#allocation10 + $0x2f0] sm:$0xff]
    %v405 = vld [vmem:[#allocation10 + $0x2f8] sm:$0xff]
    %v406 = vld [vmem:[#allocation10 + $0x300] sm:$0xff]
    %v407 = vld [vmem:[#allocation10 + $0x308] sm:$0xff]
    %v408 = vld [vmem:[#allocation10 + $0x310] sm:$0xff]
    %v409 = vld [vmem:[#allocation10 + $0x318] sm:$0xff]
    %v410 = vld [vmem:[#allocation10 + $0x320] sm:$0xff]
    %v411 = vld [vmem:[#allocation10 + $0x328] sm:$0xff]
    %v412 = vld [vmem:[#allocation10 + $0x330] sm:$0xff]
    %v413 = vld [vmem:[#allocation10 + $0x338] sm:$0xff]
    %v414 = vld [vmem:[#allocation10 + $0x340] sm:$0xff]
    %v415 = vld [vmem:[#allocation10 + $0x348] sm:$0xff]
    %v416 = vld [vmem:[#allocation10 + $0x350] sm:$0xff]
    %v417 = vld [vmem:[#allocation10 + $0x358] sm:$0xff]
    %v418 = vld [vmem:[#allocation10 + $0x360] sm:$0xff]
    %v419 = vld [vmem:[#allocation10 + $0x368] sm:$0xff]
    %v420 = vld [vmem:[#allocation10 + $0x370] sm:$0xff]
    %v421 = vld [vmem:[#allocation10 + $0x378] sm:$0xff]
    %v422 = vld [vmem:[#allocation10 + $0x380] sm:$0xff]
    %v423 = vld [vmem:[#allocation10 + $0x388] sm:$0xff]
    %v424 = vld [vmem:[#allocation10 + $0x390] sm:$0xff]
    %v425 = vld [vmem:[#allocation10 + $0x398] sm:$0xff]
    %v426 = vld [vmem:[#allocation10 + $0x3a0] sm:$0xff]
    %v427 = vld [vmem:[#allocation10 + $0x3a8] sm:$0xff]
    %v428 = vld [vmem:[#allocation10 + $0x3b0] sm:$0xff]
    %v429 = vld [vmem:[#allocation10 + $0x3b8] sm:$0xff]
    %v430 = vld [vmem:[#allocation10 + $0x3c0] sm:$0xff]
    %v431 = vld [vmem:[#allocation10 + $0x3c8] sm:$0xff]
    %v432 = vld [vmem:[#allocation10 + $0x3d0] sm:$0xff]
    %v433 = vld [vmem:[#allocation10 + $0x3d8] sm:$0xff]
    %v434 = vld [vmem:[#allocation10 + $0x3e0] sm:$0xff]
    %v435 = vld [vmem:[#allocation10 + $0x3e8] sm:$0xff]
    %v436 = vld [vmem:[#allocation10 + $0x3f0] sm:$0xff]
    %v437 = vld [vmem:[#allocation10 + $0x3f8] sm:$0xff]
    %v438 = vld [vmem:[%s6] sm:$0x3]
    %v440 = vperm.slane %v438, 0
    %v441 = vperm.slane %v438, 1
    %444 = vmatpush.msra.mxu0 %v340
    %445 = vmatpush.msra.mxu0 %v338
    %446 = vmatpush.msra.mxu0 %v336
    %447 = vmatpush.msra.mxu0 %v334
    %448 = vmatpush.msra.mxu0 %v332
    %449 = vmatpush.msra.mxu0 %v330
    %450 = vmatpush.msra.mxu0 %v328
    %451 = vmatpush.msra.mxu0 %v326
    %452 = vmatpush.msra.mxu0 %v324
    %453 = vmatpush.msra.mxu0 %v322
    %454 = vmatpush.msra.mxu0 %v320
    %455 = vmatpush.msra.mxu0 %v318
    %456 = vmatpush.msra.mxu0 %v316
    %457 = vmatpush.msra.mxu0 %v314
    %458 = vmatpush.msra.mxu0 %v312
    %459 = vmatpush.msra.mxu0 %v310
    %460 = vmatmul.f32.gmra.mxu0 %v306
    %v461 = vpop.f32.mrf.mxu0
    %v462 = vadd.f32 %v440, %v461
    %463 = vdwg.mxu0
    %464 = vmatpush.msra.mxu0 %v372
    %465 = vmatpush.msra.mxu0 %v370
    %466 = vmatpush.msra.mxu0 %v368
    %467 = vmatpush.msra.mxu0 %v366
    %468 = vmatpush.msra.mxu0 %v364
    %469 = vmatpush.msra.mxu0 %v362
    %470 = vmatpush.msra.mxu0 %v360
    %471 = vmatpush.msra.mxu0 %v358
    %472 = vmatpush.msra.mxu0 %v356
    %473 = vmatpush.msra.mxu0 %v354
    %474 = vmatpush.msra.mxu0 %v352
    %475 = vmatpush.msra.mxu0 %v350
    %476 = vmatpush.msra.mxu0 %v348
    %477 = vmatpush.msra.mxu0 %v346
    %478 = vmatpush.msra.mxu0 %v344
    %479 = vmatpush.msra.mxu0 %v342
    %480 = vmatmul.f32.gmra.mxu0 %v307
    %v481 = vpop.f32.mrf.mxu0
    %v482 = vadd.f32 %v462, %v481
    %483 = vdwg.mxu0
    %484 = vmatpush.msra.mxu0 %v404
    %485 = vmatpush.msra.mxu0 %v402
    %486 = vmatpush.msra.mxu0 %v400
    %487 = vmatpush.msra.mxu0 %v398
    %488 = vmatpush.msra.mxu0 %v396
    %489 = vmatpush.msra.mxu0 %v394
    %490 = vmatpush.msra.mxu0 %v392
    %491 = vmatpush.msra.mxu0 %v390
    %492 = vmatpush.msra.mxu0 %v388
    %493 = vmatpush.msra.mxu0 %v386
    %494 = vmatpush.msra.mxu0 %v384
    %495 = vmatpush.msra.mxu0 %v382
    %496 = vmatpush.msra.mxu0 %v380
    %497 = vmatpush.msra.mxu0 %v378
    %498 = vmatpush.msra.mxu0 %v376
    %499 = vmatpush.msra.mxu0 %v374
    %500 = vmatmul.f32.gmra.mxu0 %v308
    %v501 = vpop.f32.mrf.mxu0
    %v502 = vadd.f32 %v482, %v501
    %503 = vdwg.mxu0
    %504 = vmatpush.msra.mxu0 %v436
    %505 = vmatpush.msra.mxu0 %v434
    %506 = vmatpush.msra.mxu0 %v432
    %507 = vmatpush.msra.mxu0 %v430
    %508 = vmatpush.msra.mxu0 %v428
    %509 = vmatpush.msra.mxu0 %v426
    %510 = vmatpush.msra.mxu0 %v424
    %511 = vmatpush.msra.mxu0 %v422
    %512 = vmatpush.msra.mxu0 %v420
    %513 = vmatpush.msra.mxu0 %v418
    %514 = vmatpush.msra.mxu0 %v416
    %515 = vmatpush.msra.mxu0 %v414
    %516 = vmatpush.msra.mxu0 %v412
    %517 = vmatpush.msra.mxu0 %v410
    %518 = vmatpush.msra.mxu0 %v408
    %519 = vmatpush.msra.mxu0 %v406
    %520 = vmatmul.f32.gmra.mxu0 %v309
    %v521 = vpop.f32.mrf.mxu0
    %v522 = vadd.f32 %v502, %v521
    %523 = vdwg.mxu0
    %524 = vmatpush.msra.mxu0 %v341
    %525 = vmatpush.msra.mxu0 %v339
    %526 = vmatpush.msra.mxu0 %v337
    %527 = vmatpush.msra.mxu0 %v335
    %528 = vmatpush.msra.mxu0 %v333
    %529 = vmatpush.msra.mxu0 %v331
    %530 = vmatpush.msra.mxu0 %v329
    %531 = vmatpush.msra.mxu0 %v327
    %532 = vmatpush.msra.mxu0 %v325
    %533 = vmatpush.msra.mxu0 %v323
    %534 = vmatpush.msra.mxu0 %v321
    %535 = vmatpush.msra.mxu0 %v319
    %536 = vmatpush.msra.mxu0 %v317
    %537 = vmatpush.msra.mxu0 %v315
    %538 = vmatpush.msra.mxu0 %v313
    %539 = vmatpush.msra.mxu0 %v311
    %540 = vmatmul.f32.gmra.mxu0 %v306
    %v541 = vpop.f32.mrf.mxu0
    %v542 = vadd.f32 %v441, %v541
    %543 = vdwg.mxu0
    %544 = vmatpush.msra.mxu0 %v373
    %545 = vmatpush.msra.mxu0 %v371
    %546 = vmatpush.msra.mxu0 %v369
    %547 = vmatpush.msra.mxu0 %v367
    %548 = vmatpush.msra.mxu0 %v365
    %549 = vmatpush.msra.mxu0 %v363
    %550 = vmatpush.msra.mxu0 %v361
    %551 = vmatpush.msra.mxu0 %v359
    %552 = vmatpush.msra.mxu0 %v357
    %553 = vmatpush.msra.mxu0 %v355
    %554 = vmatpush.msra.mxu0 %v353
    %555 = vmatpush.msra.mxu0 %v351
    %556 = vmatpush.msra.mxu0 %v349
    %557 = vmatpush.msra.mxu0 %v347
    %558 = vmatpush.msra.mxu0 %v345
    %559 = vmatpush.msra.mxu0 %v343
    %560 = vmatmul.f32.gmra.mxu0 %v307
    %v561 = vpop.f32.mrf.mxu0
    %v562 = vadd.f32 %v542, %v561
    %563 = vdwg.mxu0
    %564 = vmatpush.msra.mxu0 %v405
    %565 = vmatpush.msra.mxu0 %v403
    %566 = vmatpush.msra.mxu0 %v401
    %567 = vmatpush.msra.mxu0 %v399
    %568 = vmatpush.msra.mxu0 %v397
    %569 = vmatpush.msra.mxu0 %v395
    %570 = vmatpush.msra.mxu0 %v393
    %571 = vmatpush.msra.mxu0 %v391
    %572 = vmatpush.msra.mxu0 %v389
    %573 = vmatpush.msra.mxu0 %v387
    %574 = vmatpush.msra.mxu0 %v385
    %575 = vmatpush.msra.mxu0 %v383
    %576 = vmatpush.msra.mxu0 %v381
    %577 = vmatpush.msra.mxu0 %v379
    %578 = vmatpush.msra.mxu0 %v377
    %579 = vmatpush.msra.mxu0 %v375
    %580 = vmatmul.f32.gmra.mxu0 %v308
    %v581 = vpop.f32.mrf.mxu0
    %v582 = vadd.f32 %v562, %v581
    %583 = vdwg.mxu0
    %584 = vmatpush.msra.mxu0 %v437
    %585 = vmatpush.msra.mxu0 %v435
    %586 = vmatpush.msra.mxu0 %v433
    %587 = vmatpush.msra.mxu0 %v431
    %588 = vmatpush.msra.mxu0 %v429
    %589 = vmatpush.msra.mxu0 %v427
    %590 = vmatpush.msra.mxu0 %v425
    %591 = vmatpush.msra.mxu0 %v423
    %592 = vmatpush.msra.mxu0 %v421
    %593 = vmatpush.msra.mxu0 %v419
    %594 = vmatpush.msra.mxu0 %v417
    %595 = vmatpush.msra.mxu0 %v415
    %596 = vmatpush.msra.mxu0 %v413
    %597 = vmatpush.msra.mxu0 %v411
    %598 = vmatpush.msra.mxu0 %v409
    %599 = vmatpush.msra.mxu0 %v407
    %600 = vmatmul.f32.gmra.mxu0 %v309
    %v601 = vpop.f32.mrf.mxu0
    %v602 = vadd.f32 %v582, %v601
    %603 = vdwg.mxu0
    %v604 = vmax.f32 %v522, 0.0
    %v605 = vmax.f32 %v602, 0.0
    %v606 = vld [vmem:[%s7] sm:$0x3]
    %v608 = vperm.slane %v606, 0
    %v609 = vperm.slane %v606, 1
    %v612 = vmul.f32 %v604, %v608
    %v613 = vmul.f32 %v605, %v609
    %v614 = vadd.f32 %v612, %v613
    %615 = vadd.xlane.f32.xlu0 %v614
    %v616 = vpop.xlane.xlu0 %615
    %v617 = vld [vmem:[#allocation2] sm:$0x1]
    %v619 = vperm.slane %v617, 0
    %v621 = vadd.f32 %v616, %v619
    %vm622 = vcmask 7168
    %623 = vst.msk [vmem:[%s9] sm:$0xff] %vm622, %v621
    // Predicated region
    $region58: #{critic_forward.1} parent=1 // pred_check
      _
    $region59: #{critic_forward.1} parent=1 // pred_check_branch
      %625 = sbr.rel (0) target = $region61
    $region60: #{critic_forward.1} parent=1 // pred_region
      _
    $region61: #{critic_forward.1} parent=1 // pred_fallthru
      _
    // Predicated region
    $region62: #{critic_forward.1} parent=1 // pred_check
      _
    $region63: #{critic_forward.1} parent=1 // pred_check_branch
      %627 = sbr.rel (0) target = $region65
    $region64: #{critic_forward.1} parent=1 // pred_region
      _
    $region65: #{critic_forward.1} parent=1 // pred_fallthru
      _
    %628 = vsyncpa [#allocation4], 1
    %629 = vsyncpa [#allocation6], 1
    %630 = vsyncpa [#allocation9], 1

</llo_original>
